<compile_context>
chip_gen: v7x
topology: tpu7x:2x2x1
jax: 0.10.0
libtpu: 0.0.40
codegen_flags: <defaults>
</compile_context>

<pallas_src>
import jax
import jax.numpy as jnp
from jax.experimental import pallas as pl
from jax.experimental.pallas import tpu as pltpu


IN_DIM = 2
COND_DIM = 16
K_DIM = IN_DIM + COND_DIM          # 18 input features after the fused concat
K_PAD = 32                         # features zero-padded to an aligned K
HIDDEN = 128


def _round_up(n, m):
    return ((n + m - 1) // m) * m


def _leaky_relu(x, slope=0.01):
    # PyTorch nn.LeakyReLU default negative_slope = 0.01
    return jnp.where(x > 0, x, slope * x)


def discriminator_kernel(xc_ref, w1t_ref, b1_ref, w2t_ref, b2_ref,
                         w3r_ref, b3_ref, o_ref):
    """One batch tile (TB columns) of the fused 3-layer MLP, feature-major.

    xc_ref  : (K_PAD, TB)      concat([x, bits]).T, zero-padded, matmul dtype
    w1t_ref : (HIDDEN, K_PAD)  W1.T, zero-padded along K, matmul dtype
    b1_ref  : (HIDDEN, 1)      f32
    w2t_ref : (HIDDEN, HIDDEN) W2.T, matmul dtype
    b2_ref  : (HIDDEN, 1)      f32
    w3r_ref : (1, HIDDEN)      W3.T, matmul dtype
    b3_ref  : (1, 1)           f32 scalar in SMEM
    o_ref   : (1, TB)          f32, lane-dense output block
    """
    mm_dtype = w2t_ref.dtype

    # Layer 1: fused concat + Linear(18,128) as one K=32 dot:
    #   (H, K_PAD) @ (K_PAD, TB) -> (H, TB); zero feature padding is a no-op.
    h1 = (jnp.dot(w1t_ref[...], xc_ref[...],
                  preferred_element_type=jnp.float32) + b1_ref[...])
    h1 = _leaky_relu(h1)                                        # (H, TB) f32

    # Layer 2: Linear(128,128) + LeakyReLU (f32 accumulation / VPU math).
    h2 = (jnp.dot(w2t_ref[...], h1.astype(mm_dtype),
                  preferred_element_type=jnp.float32) + b2_ref[...])
    h2 = _leaky_relu(h2)                                        # (H, TB) f32

    # Layer 3: Linear(128,1) + Sigmoid.  (1,H)@(H,TB) -> (1,TB): lane-dense,
    # contraction dim already leading on the RHS -> no hidden XLU transpose.
    logits = jnp.dot(w3r_ref[...], h2.astype(mm_dtype),
                     preferred_element_type=jnp.float32)        # (1, TB)
    o_ref[...] = jax.nn.sigmoid(logits + b3_ref[0, 0])


def discriminator_forward(x, bits, prepared_params, *, block_rows=4096):
    """x: (B, IN_DIM), bits: (B, COND_DIM). Returns (B, 1) probabilities.

    `prepared_params` must come from prepare_params() (kernel layout / dtype).
    """
    w1t, b1, w2t, b2, w3r, b3 = prepared_params
    mm_dtype = w2t.dtype
    B = x.shape[0]
    assert x.shape == (B, IN_DIM) and bits.shape == (B, COND_DIM)

    # 128-aligned batch tile (lane-dense stores, clean MXU tiling).
    tb = min(_round_up(block_rows, 128), _round_up(B, 128))
    # Keep >= 2 grid steps when possible so the "parallel" batch axis can be
    # split across both v7x TensorCores instead of collapsing to nb=1.
    if _round_up(B, tb) // tb == 1 and tb >= 256:
        tb = _round_up(tb // 2, 128)
    b_pad = _round_up(B, tb)
    nb = b_pad // tb

    # Fused concat -> cast -> pad (batch to b_pad, features to K_PAD) -> transpose.
    xc = jnp.concatenate([x, bits], axis=1).astype(mm_dtype)        # (B, 18)
    xc = jnp.pad(xc, ((0, b_pad - B), (0, K_PAD - K_DIM)))          # (b_pad, 32)
    xct = xc.T                                                      # (32, b_pad)

    in_bytes = jnp.dtype(mm_dtype).itemsize
    cost = pl.CostEstimate(
        flops=2 * b_pad * (K_DIM * HIDDEN + HIDDEN * HIDDEN + HIDDEN),
        transcendentals=b_pad,
        bytes_accessed=(b_pad * (K_PAD * in_bytes + 4)
                        + (K_PAD + HIDDEN + 1) * HIDDEN * in_bytes
                        + (2 * HIDDEN + 1) * 4),
    )

    col_block = lambda i: (0, i)   # streamed batch-column tiles
    pinned = lambda i: (0, 0)      # weights/biases: constant index -> fetched once

    out = pl.pallas_call(
        discriminator_kernel,
        out_shape=jax.ShapeDtypeStruct((1, b_pad), jnp.float32),
        grid=(nb,),
        in_specs=[
            pl.BlockSpec((K_PAD, tb), col_block),                    # xct
            pl.BlockSpec((HIDDEN, K_PAD), pinned),                   # W1.T (padded)
            pl.BlockSpec((HIDDEN, 1), pinned),                       # b1
            pl.BlockSpec((HIDDEN, HIDDEN), pinned),                  # W2.T
            pl.BlockSpec((HIDDEN, 1), pinned),                       # b2
            pl.BlockSpec((1, HIDDEN), pinned),                       # W3.T
            pl.BlockSpec(memory_space=pltpu.MemorySpace.SMEM),       # b3 scalar
        ],
        out_specs=pl.BlockSpec((1, tb), col_block),
        compiler_params=pltpu.CompilerParams(
            dimension_semantics=("parallel",)),
        cost_estimate=cost,
    )(xct, w1t, b1, w2t, b2, w3r, b3)

    # (1, b_pad) lane-dense row -> (B, 1); column i*tb + t is batch row i*tb + t.
    return out.reshape(b_pad)[:B].reshape(B, 1)


def init_params(key):
    """PyTorch-Linear-style init (U[-1/sqrt(fan_in), 1/sqrt(fan_in)]).
    Logical layout: W as (in, out), biases 1-D, all f32."""
    def linear(key, fan_in, fan_out):
        kw, kb = jax.random.split(key)
        bound = 1.0 / jnp.sqrt(fan_in)
        w = jax.random.uniform(kw, (fan_in, fan_out), jnp.float32, -bound, bound)
        b = jax.random.uniform(kb, (fan_out,), jnp.float32, -bound, bound)
        return w, b

    k1, k2, k3 = jax.random.split(key, 3)
    w1, b1 = linear(k1, K_DIM, HIDDEN)     # (18,128), (128,)
    w2, b2 = linear(k2, HIDDEN, HIDDEN)    # (128,128), (128,)
    w3, b3 = linear(k3, HIDDEN, 1)         # (128,1), (1,)
    return (w1, b1, w2, b2, w3, b3)


def prepare_params(params, matmul_dtype=jnp.bfloat16):
    """One-time conversion to kernel layout/dtype (do this OUTSIDE the hot loop):
    weights transposed to feature-major, W1 zero-padded along K to K_PAD,
    matmul operands cast to matmul_dtype, biases kept f32."""
    w1, b1, w2, b2, w3, b3 = params
    w1t = jnp.pad(w1.T, ((0, 0), (0, K_PAD - K_DIM))).astype(matmul_dtype)  # (H, 32)
    w2t = w2.T.astype(matmul_dtype)                                          # (H, H)
    w3r = w3.T.astype(matmul_dtype)                                          # (1, H)
    return (w1t,
            b1.reshape(HIDDEN, 1).astype(jnp.float32),
            w2t,
            b2.reshape(HIDDEN, 1).astype(jnp.float32),
            w3r,
            b3.reshape(1, 1).astype(jnp.float32))


def reference_forward(x, bits, params):
    """Pure-JAX f32 reference matching the PyTorch module semantics."""
    w1, b1, w2, b2, w3, b3 = params
    h = jnp.concatenate([x, bits], axis=1)
    h = _leaky_relu(h @ w1 + b1[None, :])
    h = _leaky_relu(h @ w2 + b2[None, :])
    return jax.nn.sigmoid(h @ w3 + b3[None, :])


if __name__ == "__main__":
    key = jax.random.PRNGKey(0)
    kx, kb, kp = jax.random.split(key, 3)

    B = 200
    x = jax.random.normal(kx, (B, IN_DIM), jnp.float32)
    bits = jax.random.bernoulli(kb, 0.5, (B, COND_DIM)).astype(jnp.float32)
    params = init_params(kp)

    ref = reference_forward(x, bits, params)

    # Default bf16-matmul path (exercises the 2-step grid + batch/feature padding).
    prep_bf16 = prepare_params(params, jnp.bfloat16)
    out_bf16 = jax.block_until_ready(discriminator_forward(x, bits, prep_bf16))
    assert out_bf16.shape == (B, 1), out_bf16.shape
    assert jnp.allclose(out_bf16, ref, atol=3e-2), \
        float(jnp.max(jnp.abs(out_bf16 - ref)))

    # f32 path, tight tolerance against the pure-JAX reference.
    prep_f32 = prepare_params(params, jnp.float32)
    out_f32 = jax.block_until_ready(discriminator_forward(x, bits, prep_f32))
    assert out_f32.shape == (B, 1), out_f32.shape
    assert jnp.allclose(out_f32, ref, atol=1e-4), \
        float(jnp.max(jnp.abs(out_f32 - ref)))

    print("KERNEL_OK")
</pallas_src>

<mosaic_0001>
module attributes {stable_mosaic.version = 11 : i64} {
  func.func @discriminator_kernel(%arg0: i32, %arg1: memref<32x128xbf16, #tpu.memory_space<vmem>>, %arg2: memref<128x32xbf16, #tpu.memory_space<vmem>>, %arg3: memref<128x1xf32, #tpu.memory_space<vmem>>, %arg4: memref<128x128xbf16, #tpu.memory_space<vmem>>, %arg5: memref<128x1xf32, #tpu.memory_space<vmem>>, %arg6: memref<1x128xbf16, #tpu.memory_space<vmem>>, %arg7: memref<1x1xf32, #tpu.memory_space<smem>>, %arg8: memref<1x128xf32, #tpu.memory_space<vmem>>) attributes {dimension_semantics = [#tpu.dimension_semantics<parallel>], iteration_bounds = array<i64: 2>, scalar_prefetch = 0 : i64, scratch_operands = 0 : i64, tpu.core_type = #tpu.core_type<tc>, window_params = [{transform_indices = @transform_0, window_bounds = array<i64: 32, 128>}, {pipeline_mode = #tpu.pipeline_mode<synchronous>, transform_indices = @transform_1, window_bounds = array<i64: 128, 32>}, {pipeline_mode = #tpu.pipeline_mode<synchronous>, transform_indices = @transform_2, window_bounds = array<i64: 128, 1>}, {pipeline_mode = #tpu.pipeline_mode<synchronous>, transform_indices = @transform_3, window_bounds = array<i64: 128, 128>}, {pipeline_mode = #tpu.pipeline_mode<synchronous>, transform_indices = @transform_4, window_bounds = array<i64: 128, 1>}, {pipeline_mode = #tpu.pipeline_mode<synchronous>, transform_indices = @transform_5, window_bounds = array<i64: 1, 128>}, {transform_indices = @transform_6, window_bounds = array<i64: 1, 1>}, {transform_indices = @transform_7, window_bounds = array<i64: 1, 128>}]} {
    %c0 = arith.constant 0 : index
    %c0_0 = arith.constant 0 : index
    %0 = vector.load %arg2[%c0, %c0_0] : memref<128x32xbf16, #tpu.memory_space<vmem>>, vector<128x32xbf16>
    %c0_1 = arith.constant 0 : index
    %c0_2 = arith.constant 0 : index
    %1 = vector.load %arg1[%c0_1, %c0_2] : memref<32x128xbf16, #tpu.memory_space<vmem>>, vector<32x128xbf16>
    %cst = arith.constant dense<0.000000e+00> : vector<128x128xf32>
    %2 = tpu.matmul %0, %1, %cst {dimension_numbers = #tpu.dot_dimension_numbers<[1], [0], [0], [1], [0, 0, 1, 1], [], []>} : vector<128x32xbf16>, vector<32x128xbf16>, vector<128x128xf32> -> vector<128x128xf32>
    %c0_3 = arith.constant 0 : index
    %c0_4 = arith.constant 0 : index
    %3 = vector.load %arg3[%c0_3, %c0_4] : memref<128x1xf32, #tpu.memory_space<vmem>>, vector<128x1xf32>
    %4 = vector.broadcast %3 : vector<128x1xf32> to vector<128x128xf32>
    %5 = arith.addf %2, %4 : vector<128x128xf32>
    %cst_5 = arith.constant 0.000000e+00 : f32
    %6 = vector.broadcast %cst_5 : f32 to vector<128x128xf32>
    %7 = arith.cmpf ogt, %5, %6 : vector<128x128xf32>
    %cst_6 = arith.constant 0.00999999977 : f32
    %8 = vector.broadcast %cst_6 : f32 to vector<128x128xf32>
    %9 = arith.mulf %8, %5 : vector<128x128xf32>
    %10 = arith.select %7, %5, %9 : vector<128x128xi1>, vector<128x128xf32>
    %c0_7 = arith.constant 0 : index
    %c0_8 = arith.constant 0 : index
    %11 = vector.load %arg4[%c0_7, %c0_8] : memref<128x128xbf16, #tpu.memory_space<vmem>>, vector<128x128xbf16>
    %12 = arith.truncf %10 : vector<128x128xf32> to vector<128x128xbf16>
    %cst_9 = arith.constant dense<0.000000e+00> : vector<128x128xf32>
    %13 = tpu.matmul %11, %12, %cst_9 {dimension_numbers = #tpu.dot_dimension_numbers<[1], [0], [0], [1], [0, 0, 1, 1], [], []>} : vector<128x128xbf16>, vector<128x128xbf16>, vector<128x128xf32> -> vector<128x128xf32>
    %c0_10 = arith.constant 0 : index
    %c0_11 = arith.constant 0 : index
    %14 = vector.load %arg5[%c0_10, %c0_11] : memref<128x1xf32, #tpu.memory_space<vmem>>, vector<128x1xf32>
    %15 = vector.broadcast %14 : vector<128x1xf32> to vector<128x128xf32>
    %16 = arith.addf %13, %15 : vector<128x128xf32>
    %cst_12 = arith.constant 0.000000e+00 : f32
    %17 = vector.broadcast %cst_12 : f32 to vector<128x128xf32>
    %18 = arith.cmpf ogt, %16, %17 : vector<128x128xf32>
    %cst_13 = arith.constant 0.00999999977 : f32
    %19 = vector.broadcast %cst_13 : f32 to vector<128x128xf32>
    %20 = arith.mulf %19, %16 : vector<128x128xf32>
    %21 = arith.select %18, %16, %20 : vector<128x128xi1>, vector<128x128xf32>
    %c0_14 = arith.constant 0 : index
    %c0_15 = arith.constant 0 : index
    %22 = vector.load %arg6[%c0_14, %c0_15] : memref<1x128xbf16, #tpu.memory_space<vmem>>, vector<1x128xbf16>
    %23 = arith.truncf %21 : vector<128x128xf32> to vector<128x128xbf16>
    %cst_16 = arith.constant dense<0.000000e+00> : vector<1x128xf32>
    %24 = tpu.matmul %22, %23, %cst_16 {dimension_numbers = #tpu.dot_dimension_numbers<[1], [0], [0], [1], [0, 0, 1, 1], [], []>} : vector<1x128xbf16>, vector<128x128xbf16>, vector<1x128xf32> -> vector<1x128xf32>
    %c0_17 = arith.constant 0 : index
    %c0_18 = arith.constant 0 : index
    %25 = memref.load %arg7[%c0_17, %c0_18] : memref<1x1xf32, #tpu.memory_space<smem>>
    %26 = vector.broadcast %25 : f32 to vector<1x128xf32>
    %27 = arith.addf %24, %26 : vector<1x128xf32>
    %28 = arith.negf %27 : vector<1x128xf32>
    %29 = math.exp %28 : vector<1x128xf32>
    %cst_19 = arith.constant 1.000000e+00 : f32
    %30 = vector.broadcast %cst_19 : f32 to vector<1x128xf32>
    %31 = arith.addf %30, %29 : vector<1x128xf32>
    %32 = arith.divf %30, %31 : vector<1x128xf32>
    %c0_20 = arith.constant 0 : index
    %c0_21 = arith.constant 0 : index
    %33 = vector.load %arg8[%c0_20, %c0_21] : memref<1x128xf32, #tpu.memory_space<vmem>>, vector<1x128xf32>
    tpu.vector_store %arg8[%c0_20, %c0_21], %32 {strides = array<i32>} : memref<1x128xf32, #tpu.memory_space<vmem>>, vector<1x128xf32>,
    return
  }
  func.func @transform_0(%arg0: i32) -> (i32, i32) {
    %c0_i32 = arith.constant 0 : i32
    %c0_i32_0 = arith.constant 0 : i32
    return %c0_i32, %arg0 : i32, i32
  }
  func.func @transform_1(%arg0: i32) -> (i32, i32) {
    %c0_i32 = arith.constant 0 : i32
    %c0_i32_0 = arith.constant 0 : i32
    %c0_i32_1 = arith.constant 0 : i32
    return %c0_i32, %c0_i32_0 : i32, i32
  }
  func.func @transform_2(%arg0: i32) -> (i32, i32) {
    %c0_i32 = arith.constant 0 : i32
    %c0_i32_0 = arith.constant 0 : i32
    %c0_i32_1 = arith.constant 0 : i32
    return %c0_i32, %c0_i32_0 : i32, i32
  }
  func.func @transform_3(%arg0: i32) -> (i32, i32) {
    %c0_i32 = arith.constant 0 : i32
    %c0_i32_0 = arith.constant 0 : i32
    %c0_i32_1 = arith.constant 0 : i32
    return %c0_i32, %c0_i32_0 : i32, i32
  }
  func.func @transform_4(%arg0: i32) -> (i32, i32) {
    %c0_i32 = arith.constant 0 : i32
    %c0_i32_0 = arith.constant 0 : i32
    %c0_i32_1 = arith.constant 0 : i32
    return %c0_i32, %c0_i32_0 : i32, i32
  }
  func.func @transform_5(%arg0: i32) -> (i32, i32) {
    %c0_i32 = arith.constant 0 : i32
    %c0_i32_0 = arith.constant 0 : i32
    %c0_i32_1 = arith.constant 0 : i32
    return %c0_i32, %c0_i32_0 : i32, i32
  }
  func.func @transform_6(%arg0: i32) -> (i32, i32) {
    %c0_i32 = arith.constant 0 : i32
    %c0_i32_0 = arith.constant 0 : i32
    %c0_i32_1 = arith.constant 0 : i32
    return %c0_i32, %c0_i32_0 : i32, i32
  }
  func.func @transform_7(%arg0: i32) -> (i32, i32) {
    %c0_i32 = arith.constant 0 : i32
    %c0_i32_0 = arith.constant 0 : i32
    return %c0_i32, %arg0 : i32, i32
  }
}

</mosaic_0001>

<llo_original>
// kernel: tpu_custom_call.1
$region0: #{tpu_custom_call.1}
  #allocation0 [shape = 'u32[]', space=smem, size = 0x4, offset = 0x4, fixed_abs, tag = 'smem constant byte address 0x4 - core index']
  #allocation1 [shape = 'u32[144,128]{1,0:T(1,128)}', space=vmem, size = 0x12000, scoped, tag = 'internal scratch']
  #allocation2 [shape = 'f32[1,1]{1,0:T(1,128)S(6)}', space=smem, size = 0x200, scoped, tag = 'scoped memory for tpu_custom_call.1']
  %s0 = inlined_call_operand.vmem [shape: bf16[32,256], index: 0, kind: input, shape index: {}]
  %s1 = inlined_call_operand.vmem [shape: bf16[128,32], index: 1, kind: input, shape index: {}]
  %s2 = inlined_call_operand.vmem [shape: f32[128,1], index: 2, kind: input, shape index: {}]
  %s3 = inlined_call_operand.vmem [shape: bf16[128,128], index: 3, kind: input, shape index: {}]
  %s4 = inlined_call_operand.vmem [shape: f32[128,1], index: 4, kind: input, shape index: {}]
  %s5 = inlined_call_operand.vmem [shape: bf16[1,128], index: 5, kind: input, shape index: {}]
  %s6 = inlined_call_operand.<no memory space> [shape: f32[1,1], index: 6, kind: input, shape index: {}]
  %s7 = inlined_call_operand.hbm [shape: f32[1,256], index: 7, kind: output, shape index: {}]
  %s8 = sld [smem:[#allocation0]]
  $region102: #{tpu_custom_call.1} parent=0
    _
  %s10 = ssub.s32 1, %s8
  %s11 = scalar_select 0, %s10, %s8
  %12 = sst [smem:[#allocation2]] %s6
  $region1: #{tpu_custom_call.1} parent=0
    #allocation3 [shape = 'u8[16384]{0}', space=vmem, size = 0x4000, scoped, tag = 'input window, operand 0']
    #allocation4 [shape = 'u8[1024]{0}', space=vmem, size = 0x400, scoped, tag = 'output window, operand 0']
    #allocation5 [shape = 's32[2]{0}', space=sflag, size = 0x8, scoped, tag = 'scoped memory for tpu_custom_call.1']
    %13 = vsyncpa [#allocation5], 0
    %s14 = scalar_lea.sflag [#allocation5], 1
    %15 = vsyncpa %s14, 0
    loop: start=0, step=1, limit=4
    $region2: #{tpu_custom_call.1} parent=1 // loop_pre_header
      _
    $region3: #{tpu_custom_call.1} parent=1 // loop_header
      %s17 = sphi 0, %s21
      %p18 = scmp.ge.s32.totalorder %s17, 4
      %s27 = sphi 0, %s29
      %s30 = sphi 0, %s27
      %s31 = sphi 0, %s30
      %s47 = sphi 0, %s31
      %s51 = sphi 0, %s51
      %s53 = sphi 0, %s51
      %s54 = sphi 0, %s53
      %s68 = sphi 0, %s54
      %s72 = sphi 0, %s72
      %s74 = sphi 0, %s72
      %s75 = sphi 0, %s74
      %s89 = sphi 0, %s75
      %s93 = sphi 0, %s93
      %s95 = sphi 0, %s93
      %s96 = sphi 0, %s95
      %s110 = sphi 0, %s96
      %s114 = sphi 0, %s114
      %s116 = sphi 0, %s114
      %s117 = sphi 0, %s116
      %s131 = sphi 0, %s117
      %s135 = sphi 0, %s135
      %s137 = sphi 0, %s135
      %s138 = sphi 0, %s137
      %s152 = sphi 0, %s138
      %s156 = sphi 0, %s156
      %s158 = sphi 0, %s156
      %s159 = sphi 0, %s158
      %s173 = sphi 0, %s159
      %s179 = sphi 0, %s181
      %s182 = sphi 0, %s179
      %s183 = sphi 0, %s182
      %s199 = sphi 0, %s183
    $region4: #{tpu_custom_call.1} parent=1 // loop_header_branch
      %20 = sbr.rel (%p18) target = $region8
    $region5: #{tpu_custom_call.1} parent=1 // loop_body
      %s22 = ssub.s32 %s17, 1
      %s23 = ssub.s32 %s17, 2
      %s24 = sadd.s32 %s17, 1
      %s25 = ssub.s32 %s17, %s24
      %p26 = scmp.eq.s32.totalorder %s25, 0
      %s28 = sadd.s32 %s27, 1
      %s29 = scalar_select %p26, %s27, %s28
      %p32 = pneg %p26
      %p33 = scmp.eq.s32.totalorder %s17, 1
      %p34 = por %p32, %p33
      %p35 = scmp.ne.s32.totalorder %s27, %s30
      %p36 = scmp.eq.s32.totalorder %s17, 0
      %p37 = por %p35, %p36
      %p38 = scmp.ne.s32.totalorder %s27, %s30
      %p39 = scmp.eq.s32.totalorder %s22, 1
      %p40 = por %p38, %p39
      %p41 = scmp.ne.s32.totalorder %s30, %s31
      %p42 = scmp.eq.s32.totalorder %s22, 0
      %p43 = por %p41, %p42
      %p44 = scmp.ne.s32.totalorder %s30, %s31
      %p45 = scmp.eq.s32.totalorder %s23, 1
      %p46 = por %p44, %p45
      %p48 = scmp.ne.s32.totalorder %s31, %s47
      %p49 = scmp.eq.s32.totalorder %s23, 0
      %p50 = por %p48, %p49
      %s52 = sadd.s32 %s51, 1
      %p55 = scmp.eq.s32.totalorder %s17, 1
      %p56 = scmp.ne.s32.totalorder %s51, %s53
      %p57 = scmp.eq.s32.totalorder %s17, 0
      %p58 = por %p56, %p57
      %p59 = scmp.ne.s32.totalorder %s51, %s53
      %p60 = scmp.eq.s32.totalorder %s22, 1
      %p61 = por %p59, %p60
      %p62 = scmp.ne.s32.totalorder %s53, %s54
      %p63 = scmp.eq.s32.totalorder %s22, 0
      %p64 = por %p62, %p63
      %p65 = scmp.ne.s32.totalorder %s53, %s54
      %p66 = scmp.eq.s32.totalorder %s23, 1
      %p67 = por %p65, %p66
      %p69 = scmp.ne.s32.totalorder %s54, %s68
      %p70 = scmp.eq.s32.totalorder %s23, 0
      %p71 = por %p69, %p70
      %s73 = sadd.s32 %s72, 1
      %p76 = scmp.eq.s32.totalorder %s17, 1
      %p77 = scmp.ne.s32.totalorder %s72, %s74
      %p78 = scmp.eq.s32.totalorder %s17, 0
      %p79 = por %p77, %p78
      %p80 = scmp.ne.s32.totalorder %s72, %s74
      %p81 = scmp.eq.s32.totalorder %s22, 1
      %p82 = por %p80, %p81
      %p83 = scmp.ne.s32.totalorder %s74, %s75
      %p84 = scmp.eq.s32.totalorder %s22, 0
      %p85 = por %p83, %p84
      %p86 = scmp.ne.s32.totalorder %s74, %s75
      %p87 = scmp.eq.s32.totalorder %s23, 1
      %p88 = por %p86, %p87
      %p90 = scmp.ne.s32.totalorder %s75, %s89
      %p91 = scmp.eq.s32.totalorder %s23, 0
      %p92 = por %p90, %p91
      %s94 = sadd.s32 %s93, 1
      %p97 = scmp.eq.s32.totalorder %s17, 1
      %p98 = scmp.ne.s32.totalorder %s93, %s95
      %p99 = scmp.eq.s32.totalorder %s17, 0
      %p100 = por %p98, %p99
      %p101 = scmp.ne.s32.totalorder %s93, %s95
      %p102 = scmp.eq.s32.totalorder %s22, 1
      %p103 = por %p101, %p102
      %p104 = scmp.ne.s32.totalorder %s95, %s96
      %p105 = scmp.eq.s32.totalorder %s22, 0
      %p106 = por %p104, %p105
      %p107 = scmp.ne.s32.totalorder %s95, %s96
      %p108 = scmp.eq.s32.totalorder %s23, 1
      %p109 = por %p107, %p108
      %p111 = scmp.ne.s32.totalorder %s96, %s110
      %p112 = scmp.eq.s32.totalorder %s23, 0
      %p113 = por %p111, %p112
      %s115 = sadd.s32 %s114, 1
      %p118 = scmp.eq.s32.totalorder %s17, 1
      %p119 = scmp.ne.s32.totalorder %s114, %s116
      %p120 = scmp.eq.s32.totalorder %s17, 0
      %p121 = por %p119, %p120
      %p122 = scmp.ne.s32.totalorder %s114, %s116
      %p123 = scmp.eq.s32.totalorder %s22, 1
      %p124 = por %p122, %p123
      %p125 = scmp.ne.s32.totalorder %s116, %s117
      %p126 = scmp.eq.s32.totalorder %s22, 0
      %p127 = por %p125, %p126
      %p128 = scmp.ne.s32.totalorder %s116, %s117
      %p129 = scmp.eq.s32.totalorder %s23, 1
      %p130 = por %p128, %p129
      %p132 = scmp.ne.s32.totalorder %s117, %s131
      %p133 = scmp.eq.s32.totalorder %s23, 0
      %p134 = por %p132, %p133
      %s136 = sadd.s32 %s135, 1
      %p139 = scmp.eq.s32.totalorder %s17, 1
      %p140 = scmp.ne.s32.totalorder %s135, %s137
      %p141 = scmp.eq.s32.totalorder %s17, 0
      %p142 = por %p140, %p141
      %p143 = scmp.ne.s32.totalorder %s135, %s137
      %p144 = scmp.eq.s32.totalorder %s22, 1
      %p145 = por %p143, %p144
      %p146 = scmp.ne.s32.totalorder %s137, %s138
      %p147 = scmp.eq.s32.totalorder %s22, 0
      %p148 = por %p146, %p147
      %p149 = scmp.ne.s32.totalorder %s137, %s138
      %p150 = scmp.eq.s32.totalorder %s23, 1
      %p151 = por %p149, %p150
      %p153 = scmp.ne.s32.totalorder %s138, %s152
      %p154 = scmp.eq.s32.totalorder %s23, 0
      %p155 = por %p153, %p154
      %s157 = sadd.s32 %s156, 1
      %p160 = scmp.eq.s32.totalorder %s17, 1
      %p161 = scmp.ne.s32.totalorder %s156, %s158
      %p162 = scmp.eq.s32.totalorder %s17, 0
      %p163 = por %p161, %p162
      %p164 = scmp.ne.s32.totalorder %s156, %s158
      %p165 = scmp.eq.s32.totalorder %s22, 1
      %p166 = por %p164, %p165
      %p167 = scmp.ne.s32.totalorder %s158, %s159
      %p168 = scmp.eq.s32.totalorder %s22, 0
      %p169 = por %p167, %p168
      %p170 = scmp.ne.s32.totalorder %s158, %s159
      %p171 = scmp.eq.s32.totalorder %s23, 1
      %p172 = por %p170, %p171
      %p174 = scmp.ne.s32.totalorder %s159, %s173
      %p175 = scmp.eq.s32.totalorder %s23, 0
      %p176 = por %p174, %p175
      %s177 = ssub.s32 %s17, %s24
      %p178 = scmp.eq.s32.totalorder %s177, 0
      %s180 = sadd.s32 %s179, 1
      %s181 = scalar_select %p178, %s179, %s180
      %p184 = pneg %p178
      %p185 = scmp.eq.s32.totalorder %s17, 1
      %p186 = por %p184, %p185
      %p187 = scmp.ne.s32.totalorder %s179, %s182
      %p188 = scmp.eq.s32.totalorder %s17, 0
      %p189 = por %p187, %p188
      %p190 = scmp.ne.s32.totalorder %s179, %s182
      %p191 = scmp.eq.s32.totalorder %s22, 1
      %p192 = por %p190, %p191
      %p193 = scmp.ne.s32.totalorder %s182, %s183
      %p194 = scmp.eq.s32.totalorder %s22, 0
      %p195 = por %p193, %p194
      %p196 = scmp.ne.s32.totalorder %s182, %s183
      %p197 = scmp.eq.s32.totalorder %s23, 1
      %p198 = por %p196, %p197
      %p200 = scmp.ne.s32.totalorder %s183, %s199
      %p201 = scmp.eq.s32.totalorder %s23, 0
      %p202 = por %p200, %p201
      %p203 = scmp.le.s32.totalorder 1, %s17
      %p204 = scmp.lt.s32.totalorder %s17, 3
      %p205 = pnand %p203, %p204
      %p206 = pneg %p205
      // Predicated region
      $region9: #{tpu_custom_call.1} parent=5 // pred_check
        _
      $region10: #{tpu_custom_call.1} parent=5 // pred_check_branch
        %208 = sbr.rel (%p205) target = $region12
      $region11: #{tpu_custom_call.1} parent=5 // pred_region
        %s209 = ssub.s32 %s17, 1
        // Predicated region
        $region13: #{tpu_custom_call.1} parent=11 // pred_check
          %p210 = pneg %p64
        $region14: #{tpu_custom_call.1} parent=11 // pred_check_branch
          %212 = sbr.rel (%p210) target = $region16
        $region15: #{tpu_custom_call.1} parent=11 // pred_region
          _
        $region16: #{tpu_custom_call.1} parent=11 // pred_fallthru
          _
        // Predicated region
        $region17: #{tpu_custom_call.1} parent=11 // pred_check
          %p213 = pneg %p85
        $region18: #{tpu_custom_call.1} parent=11 // pred_check_branch
          %215 = sbr.rel (%p213) target = $region20
        $region19: #{tpu_custom_call.1} parent=11 // pred_region
          _
        $region20: #{tpu_custom_call.1} parent=11 // pred_fallthru
          _
        // Predicated region
        $region21: #{tpu_custom_call.1} parent=11 // pred_check
          %p216 = pneg %p106
        $region22: #{tpu_custom_call.1} parent=11 // pred_check_branch
          %218 = sbr.rel (%p216) target = $region24
        $region23: #{tpu_custom_call.1} parent=11 // pred_region
          _
        $region24: #{tpu_custom_call.1} parent=11 // pred_fallthru
          _
        // Predicated region
        $region25: #{tpu_custom_call.1} parent=11 // pred_check
          %p219 = pneg %p127
        $region26: #{tpu_custom_call.1} parent=11 // pred_check_branch
          %221 = sbr.rel (%p219) target = $region28
        $region27: #{tpu_custom_call.1} parent=11 // pred_region
          _
        $region28: #{tpu_custom_call.1} parent=11 // pred_fallthru
          _
        // Predicated region
        $region29: #{tpu_custom_call.1} parent=11 // pred_check
          %p222 = pneg %p148
        $region30: #{tpu_custom_call.1} parent=11 // pred_check_branch
          %224 = sbr.rel (%p222) target = $region32
        $region31: #{tpu_custom_call.1} parent=11 // pred_region
          _
        $region32: #{tpu_custom_call.1} parent=11 // pred_fallthru
          _
        // Predicated region
        $region33: #{tpu_custom_call.1} parent=11 // pred_check
          %p225 = pneg %p169
        $region34: #{tpu_custom_call.1} parent=11 // pred_check_branch
          %227 = sbr.rel (%p225) target = $region36
        $region35: #{tpu_custom_call.1} parent=11 // pred_region
          _
        $region36: #{tpu_custom_call.1} parent=11 // pred_fallthru
          _
      $region12: #{tpu_custom_call.1} parent=5 // pred_fallthru
        _
      %p228 = scmp.lt.s32.totalorder %s17, 2
      // Predicated region
      $region37: #{tpu_custom_call.1} parent=5 // pred_check
        %p229 = pneg %p228
      $region38: #{tpu_custom_call.1} parent=5 // pred_check_branch
        %231 = sbr.rel (%p229) target = $region40
      $region39: #{tpu_custom_call.1} parent=5 // pred_region
        // Predicated region
        $region41: #{tpu_custom_call.1} parent=39 // pred_check
          %p232 = pneg %p37
        $region42: #{tpu_custom_call.1} parent=39 // pred_check_branch
          %234 = sbr.rel (%p232) target = $region44
        $region43: #{tpu_custom_call.1} parent=39 // pred_region
          %s235 = sand.u32 %s27, 1
          %s236 = sand.u32 %s27, 1
          %s237 = smul.addr %s236, 16
          %s238 = scalar_lea.vmem [#allocation3], %s237
          %s239 = smul.addr %s17, 4
          %s240 = scalar_lea.vmem %s0, %s239
          // Predicated region
          $region45: #{tpu_custom_call.1} parent=43 // pred_check
            _
          $region46: #{tpu_custom_call.1} parent=43 // pred_check_branch
            %242 = sbr.rel (0) target = $region48
          $region47: #{tpu_custom_call.1} parent=43 // pred_region
            // Predicated region
            $region49: #{tpu_custom_call.1} parent=47 // pred_check
              _
            $region50: #{tpu_custom_call.1} parent=47 // pred_check_branch
              %244 = sbr.rel target = $region52
            $region51: #{tpu_custom_call.1} parent=47 // pred_region
              // Predicated region
              $region64: #{tpu_custom_call.1} parent=51 // pred_check
                _
              $region65: #{tpu_custom_call.1} parent=51 // pred_check_branch
                %265 = sbr.rel (0) target = $region67
              $region66: #{tpu_custom_call.1} parent=51 // pred_region
                loop: start=0, step=1, limit=1
                $region68: #{tpu_custom_call.1} parent=66 // loop_pre_header
                  _
                $region69: #{tpu_custom_call.1} parent=66 // loop_header
                  %s267 = sphi 0, %s271
                  %p268 = scmp.ge.s32.totalorder %s267, 1
                  %s272 = sphi %s240, %s240
                  %s273 = sphi %s238, %s238
                $region70: #{tpu_custom_call.1} parent=66 // loop_header_branch
                  %270 = sbr.rel (%p268) target = $region74
                $region71: #{tpu_custom_call.1} parent=66 // loop_body
                  _
                $region72: #{tpu_custom_call.1} parent=66 // loop_footer
                  %s271 = sadd.s32 1, %s267
                $region73: #{tpu_custom_call.1} parent=66 // loop_footer_branch
                  %266 = sbr.rel target = $region69
                $region74: #{tpu_custom_call.1} parent=66 // loop_exit
                  _
                loop: start=0, step=1, limit=1
                $region75: #{tpu_custom_call.1} parent=66 // loop_pre_header
                  _
                $region76: #{tpu_custom_call.1} parent=66 // loop_header
                  %s276 = sphi 0, %s280
                  %p277 = scmp.ge.s32.totalorder %s276, 1
                  %s281 = sphi %s240, %s240
                  %s282 = sphi %s238, %s238
                $region77: #{tpu_custom_call.1} parent=66 // loop_header_branch
                  %279 = sbr.rel (%p277) target = $region81
                $region78: #{tpu_custom_call.1} parent=66 // loop_body
                  %v283 = vld [vmem:[%s281] sm:$0xf]
                  %284 = vst [vmem:[%s282] sm:$0xf] %v283
                  %v285 = vld [vmem:[%s281 + $0x8] sm:$0xf]
                  %286 = vst [vmem:[%s282 + $0x4] sm:$0xf] %v285
                  %v287 = vld [vmem:[%s281 + $0x10] sm:$0xf]
                  %288 = vst [vmem:[%s282 + $0x8] sm:$0xf] %v287
                  %v289 = vld [vmem:[%s281 + $0x18] sm:$0xf]
                  %290 = vst [vmem:[%s282 + $0xc] sm:$0xf] %v289
                $region79: #{tpu_custom_call.1} parent=66 // loop_footer
                  %s280 = sadd.s32 1, %s276
                $region80: #{tpu_custom_call.1} parent=66 // loop_footer_branch
                  %275 = sbr.rel target = $region76
                $region81: #{tpu_custom_call.1} parent=66 // loop_exit
                  _
              $region67: #{tpu_custom_call.1} parent=51 // pred_fallthru
                _
            $region52: #{tpu_custom_call.1} parent=47 // pred_fallthru
              _
            // Predicated region
            $region53: #{tpu_custom_call.1} parent=47 // pred_check
              _
            $region54: #{tpu_custom_call.1} parent=47 // pred_check_branch
              %246 = sbr.rel (0) target = $region56
            $region55: #{tpu_custom_call.1} parent=47 // pred_region
              loop: start=0, step=1, limit=1
              $region57: #{tpu_custom_call.1} parent=55 // loop_pre_header
                _
              $region58: #{tpu_custom_call.1} parent=55 // loop_header
                %s249 = sphi 0, %s253
                %p250 = scmp.ge.s32.totalorder %s249, 1
                %s254 = sphi %s240, %s240
                %s255 = sphi %s238, %s238
              $region59: #{tpu_custom_call.1} parent=55 // loop_header_branch
                %252 = sbr.rel (%p250) target = $region63
              $region60: #{tpu_custom_call.1} parent=55 // loop_body
                %v256 = vld [vmem:[%s254] sm:$0xf]
                %257 = vst [vmem:[%s255] sm:$0xf] %v256
                %v258 = vld [vmem:[%s254 + $0x8] sm:$0xf]
                %259 = vst [vmem:[%s255 + $0x4] sm:$0xf] %v258
                %v260 = vld [vmem:[%s254 + $0x10] sm:$0xf]
                %261 = vst [vmem:[%s255 + $0x8] sm:$0xf] %v260
                %v262 = vld [vmem:[%s254 + $0x18] sm:$0xf]
                %263 = vst [vmem:[%s255 + $0xc] sm:$0xf] %v262
              $region61: #{tpu_custom_call.1} parent=55 // loop_footer
                %s253 = sadd.s32 1, %s249
              $region62: #{tpu_custom_call.1} parent=55 // loop_footer_branch
                %248 = sbr.rel target = $region58
              $region63: #{tpu_custom_call.1} parent=55 // loop_exit
                _
            $region56: #{tpu_custom_call.1} parent=47 // pred_fallthru
              _
          $region48: #{tpu_custom_call.1} parent=43 // pred_fallthru
            _
          %291 = vnop
        $region44: #{tpu_custom_call.1} parent=39 // pred_fallthru
          _
      $region40: #{tpu_custom_call.1} parent=5 // pred_fallthru
        _
      %p292 = scmp.le.s32.totalorder 1, %s17
      %p293 = scmp.lt.s32.totalorder %s17, 3
      %p294 = pnand %p292, %p293
      %p295 = pneg %p294
      // Predicated region
      $region82: #{tpu_custom_call.1} parent=5 // pred_check
        _
      $region83: #{tpu_custom_call.1} parent=5 // pred_check_branch
        %297 = sbr.rel (%p294) target = $region85
      $region84: #{tpu_custom_call.1} parent=5 // pred_region
        %s298 = ssub.s32 %s17, 1
        %s299 = sand.u32 %s30, 1
        %s300 = sand.u32 %s30, 1
        %s301 = smul.addr %s300, 16
        %s302 = scalar_lea.vmem [#allocation3], %s301
        // Predicated region
        $region86: #{tpu_custom_call.1} parent=84 // pred_check
          %p303 = pneg %p43
        $region87: #{tpu_custom_call.1} parent=84 // pred_check_branch
          %305 = sbr.rel (%p303) target = $region89
        $region88: #{tpu_custom_call.1} parent=84 // pred_region
          _
        $region89: #{tpu_custom_call.1} parent=84 // pred_fallthru
          _
        %s306 = sand.u32 %s30, 1
        %s307 = sand.u32 %s30, 1
        %s308 = smul.addr %s307, 16
        %s309 = scalar_lea.vmem [#allocation3], %s308
        %p310 = pneg %p43
        %p311 = pneg %p40
        %p312 = pneg %p64
        %p313 = pneg %p61
        %p314 = pneg %p85
        %p315 = pneg %p82
        %p316 = pneg %p106
        %p317 = pneg %p103
        %p318 = pneg %p127
        %p319 = pneg %p124
        %p320 = pneg %p148
        %p321 = pneg %p145
        %p322 = pneg %p169
        %p323 = pneg %p166
        %p324 = pneg %p195
        %p325 = pneg %p192
        %s326 = sand.u32 %s182, 1
        %s327 = scalar_lea.sflag [#allocation5], %s326
        %s328 = sand.u32 %s182, 1
        %s329 = scalar_lea.vmem [#allocation4], %s328
        %v331 = vld [vmem:[%s1] sm:$0xf]
        %v332 = vld [vmem:[%s1 + $0x4] sm:$0xf]
        %v333 = vld [vmem:[%s1 + $0x8] sm:$0xf]
        %v334 = vld [vmem:[%s1 + $0xc] sm:$0xf]
        %v335 = vld [vmem:[%s1 + $0x10] sm:$0xf]
        %v336 = vld [vmem:[%s1 + $0x14] sm:$0xf]
        %v337 = vld [vmem:[%s1 + $0x18] sm:$0xf]
        %v338 = vld [vmem:[%s1 + $0x1c] sm:$0xf]
        %v339 = vld [vmem:[%s1 + $0x20] sm:$0xf]
        %v340 = vld [vmem:[%s1 + $0x24] sm:$0xf]
        %v341 = vld [vmem:[%s1 + $0x28] sm:$0xf]
        %v342 = vld [vmem:[%s1 + $0x2c] sm:$0xf]
        %v343 = vld [vmem:[%s1 + $0x30] sm:$0xf]
        %v344 = vld [vmem:[%s1 + $0x34] sm:$0xf]
        %v345 = vld [vmem:[%s1 + $0x38] sm:$0xf]
        %v346 = vld [vmem:[%s1 + $0x3c] sm:$0xf]
        %v347 = vld [vmem:[%s302] sm:$0xf]
        %v348 = vld [vmem:[%s302 + $0x4] sm:$0xf]
        %v349 = vld [vmem:[%s302 + $0x8] sm:$0xf]
        %v350 = vld [vmem:[%s302 + $0xc] sm:$0xf]
        %v351 = vld [vmem:[%s2] sm:$0xff]
        %v352 = vld [vmem:[%s2 + $0x8] sm:$0xff]
        %v353 = vld [vmem:[%s2 + $0x10] sm:$0xff]
        %v354 = vld [vmem:[%s2 + $0x18] sm:$0xff]
        %v355 = vld [vmem:[%s2 + $0x20] sm:$0xff]
        %v356 = vld [vmem:[%s2 + $0x28] sm:$0xff]
        %v357 = vld [vmem:[%s2 + $0x30] sm:$0xff]
        %v358 = vld [vmem:[%s2 + $0x38] sm:$0xff]
        %v359 = vld [vmem:[%s2 + $0x40] sm:$0xff]
        %v360 = vld [vmem:[%s2 + $0x48] sm:$0xff]
        %v361 = vld [vmem:[%s2 + $0x50] sm:$0xff]
        %v362 = vld [vmem:[%s2 + $0x58] sm:$0xff]
        %v363 = vld [vmem:[%s2 + $0x60] sm:$0xff]
        %v364 = vld [vmem:[%s2 + $0x68] sm:$0xff]
        %v365 = vld [vmem:[%s2 + $0x70] sm:$0xff]
        %v366 = vld [vmem:[%s2 + $0x78] sm:$0xff]
        %368 = vset.pattern.permute.xlu0 0
        %369 = vperm.xlu0 %368, %v351
        %v370 = vpop.permute.xlu0 %369
        %373 = vset.pattern.permute.xlu0 0
        %374 = vperm.xlu0 %373, %v352
        %v375 = vpop.permute.xlu0 %374
        %378 = vset.pattern.permute.xlu0 0
        %379 = vperm.xlu0 %378, %v353
        %v380 = vpop.permute.xlu0 %379
        %383 = vset.pattern.permute.xlu0 0
        %384 = vperm.xlu0 %383, %v354
        %v385 = vpop.permute.xlu0 %384
        %388 = vset.pattern.permute.xlu0 0
        %389 = vperm.xlu0 %388, %v355
        %v390 = vpop.permute.xlu0 %389
        %393 = vset.pattern.permute.xlu0 0
        %394 = vperm.xlu0 %393, %v356
        %v395 = vpop.permute.xlu0 %394
        %398 = vset.pattern.permute.xlu0 0
        %399 = vperm.xlu0 %398, %v357
        %v400 = vpop.permute.xlu0 %399
        %403 = vset.pattern.permute.xlu0 0
        %404 = vperm.xlu0 %403, %v358
        %v405 = vpop.permute.xlu0 %404
        %408 = vset.pattern.permute.xlu0 0
        %409 = vperm.xlu0 %408, %v359
        %v410 = vpop.permute.xlu0 %409
        %413 = vset.pattern.permute.xlu0 0
        %414 = vperm.xlu0 %413, %v360
        %v415 = vpop.permute.xlu0 %414
        %418 = vset.pattern.permute.xlu0 0
        %419 = vperm.xlu0 %418, %v361
        %v420 = vpop.permute.xlu0 %419
        %423 = vset.pattern.permute.xlu0 0
        %424 = vperm.xlu0 %423, %v362
        %v425 = vpop.permute.xlu0 %424
        %428 = vset.pattern.permute.xlu0 0
        %429 = vperm.xlu0 %428, %v363
        %v430 = vpop.permute.xlu0 %429
        %433 = vset.pattern.permute.xlu0 0
        %434 = vperm.xlu0 %433, %v364
        %v435 = vpop.permute.xlu0 %434
        %438 = vset.pattern.permute.xlu0 0
        %439 = vperm.xlu0 %438, %v365
        %v440 = vpop.permute.xlu0 %439
        %443 = vset.pattern.permute.xlu0 0
        %444 = vperm.xlu0 %443, %v366
        %v445 = vpop.permute.xlu0 %444
        %v463 = vunpack.c.l.b16 %v331
        %v464 = vunpack.c.l.b16 %v332
        %v465 = vunpack.c.l.b16 %v333
        %v466 = vunpack.c.l.b16 %v334
        %v467 = vunpack.c.l.b16 %v335
        %v468 = vunpack.c.l.b16 %v336
        %v469 = vunpack.c.l.b16 %v337
        %v470 = vunpack.c.l.b16 %v338
        %v471 = vunpack.c.l.b16 %v339
        %v472 = vunpack.c.l.b16 %v340
        %v473 = vunpack.c.l.b16 %v341
        %v474 = vunpack.c.l.b16 %v342
        %v475 = vunpack.c.l.b16 %v343
        %v476 = vunpack.c.l.b16 %v344
        %v477 = vunpack.c.l.b16 %v345
        %v478 = vunpack.c.l.b16 %v346
        %v479 = vpack.c.b16 %v464, %v463
        %v480 = vpack.c.b16 %v466, %v465
        %v481 = vpack.c.b16 %v468, %v467
        %v482 = vpack.c.b16 %v470, %v469
        %v483 = vpack.c.b16 %v472, %v471
        %v484 = vpack.c.b16 %v474, %v473
        %v485 = vpack.c.b16 %v476, %v475
        %v486 = vpack.c.b16 %v478, %v477
        %v491 = vunpack.c.l.b16 %v347
        %v492 = vunpack.c.l.b16 %v348
        %v493 = vunpack.c.l.b16 %v349
        %v494 = vunpack.c.l.b16 %v350
        %v495 = vpack.c.b16 %v492, %v491
        %v496 = vpack.c.b16 %v494, %v493
        %vm499 = vcmask 261120
        %v501 = vsel %vm499, %v479, 0
        %v504 = vsel %vm499, %v480, 0
        %v507 = vsel %vm499, %v481, 0
        %v510 = vsel %vm499, %v482, 0
        %v513 = vsel %vm499, %v483, 0
        %v516 = vsel %vm499, %v484, 0
        %v519 = vsel %vm499, %v485, 0
        %v522 = vsel %vm499, %v486, 0
        %524 = vmatprep.subr.bf16.mxu0 0
        %525 = vmatpush1.bf16.msra.mxu0 %v495
        %526 = vmatprep.subr.bf16.mxu0 0
        %527 = vmatpush1.bf16.msra.mxu0 %v496
        %528 = vmatprep.subr.bf16.mxu0 0
        %529 = vmatpush1.bf16.msra.mxu0 0
        %530 = vmatprep.subr.bf16.mxu0 0
        %531 = vmatpush1.bf16.msra.mxu0 0
        %532 = vmatprep.subr.bf16.mxu0 0
        %533 = vmatpush1.bf16.msra.mxu0 0
        %534 = vmatprep.subr.bf16.mxu0 0
        %535 = vmatpush1.bf16.msra.mxu0 0
        %536 = vmatprep.subr.bf16.mxu0 0
        %537 = vmatpush1.bf16.msra.mxu0 0
        %538 = vmatprep.subr.bf16.mxu0 0
        %539 = vmatpush1.bf16.msra.mxu0 0
        %540 = vmatprep.subr.bf16.mxu0 0
        %541 = vmatpush1.bf16.msra.mxu0 0
        %542 = vmatprep.subr.bf16.mxu0 0
        %543 = vmatpush1.bf16.msra.mxu0 0
        %544 = vmatprep.subr.bf16.mxu0 0
        %545 = vmatpush1.bf16.msra.mxu0 0
        %546 = vmatprep.subr.bf16.mxu0 0
        %547 = vmatpush1.bf16.msra.mxu0 0
        %548 = vmatprep.subr.bf16.mxu0 0
        %549 = vmatpush1.bf16.msra.mxu0 0
        %550 = vmatprep.subr.bf16.mxu0 0
        %551 = vmatpush1.bf16.msra.mxu0 0
        %552 = vmatprep.subr.bf16.mxu0 0
        %553 = vmatpush1.bf16.msra.mxu0 0
        %554 = vmatprep.subr.bf16.mxu0 0
        %555 = vmatpush1.bf16.msra.mxu0 0
        %556 = vmatprep.mubr.bf16.mxu0 0
        %557 = vmatmul.mubr.bf16.gmra.mrb[0].mxu0 %v501
        %v558 = vpop.f32.mrb[0].mxu0
        %v559 = vadd.f32 %v370, %v558
        %v560 = vpop.f32.mrb[0].mxu0
        %v561 = vpop.f32.mrb[0].mxu0
        %v562 = vadd.f32 %v375, %v561
        %v563 = vpop.f32.mrb[0].mxu0
        %564 = vmatprep.mubr.bf16.mxu0 0
        %565 = vmatmul.mubr.bf16.gmra.mrb[0].mxu0 %v504
        %v566 = vpop.f32.mrb[0].mxu0
        %v567 = vadd.f32 %v380, %v566
        %v568 = vpop.f32.mrb[0].mxu0
        %v569 = vpop.f32.mrb[0].mxu0
        %v570 = vadd.f32 %v385, %v569
        %v571 = vpop.f32.mrb[0].mxu0
        %572 = vmatprep.mubr.bf16.mxu0 0
        %573 = vmatmul.mubr.bf16.gmra.mrb[0].mxu0 %v507
        %v574 = vpop.f32.mrb[0].mxu0
        %v575 = vadd.f32 %v390, %v574
        %v576 = vpop.f32.mrb[0].mxu0
        %v577 = vpop.f32.mrb[0].mxu0
        %v578 = vadd.f32 %v395, %v577
        %v579 = vpop.f32.mrb[0].mxu0
        %580 = vmatprep.mubr.bf16.mxu0 0
        %581 = vmatmul.mubr.bf16.gmra.mrb[0].mxu0 %v510
        %v582 = vpop.f32.mrb[0].mxu0
        %v583 = vadd.f32 %v400, %v582
        %v584 = vpop.f32.mrb[0].mxu0
        %v585 = vpop.f32.mrb[0].mxu0
        %v586 = vadd.f32 %v405, %v585
        %v587 = vpop.f32.mrb[0].mxu0
        %588 = vmatprep.mubr.bf16.mxu0 0
        %589 = vmatmul.mubr.bf16.gmra.mrb[0].mxu0 %v513
        %v590 = vpop.f32.mrb[0].mxu0
        %v591 = vadd.f32 %v410, %v590
        %v592 = vpop.f32.mrb[0].mxu0
        %v593 = vpop.f32.mrb[0].mxu0
        %v594 = vadd.f32 %v415, %v593
        %v595 = vpop.f32.mrb[0].mxu0
        %596 = vmatprep.mubr.bf16.mxu0 0
        %597 = vmatmul.mubr.bf16.gmra.mrb[0].mxu0 %v516
        %v598 = vpop.f32.mrb[0].mxu0
        %v599 = vadd.f32 %v420, %v598
        %v600 = vpop.f32.mrb[0].mxu0
        %v601 = vpop.f32.mrb[0].mxu0
        %v602 = vadd.f32 %v425, %v601
        %v603 = vpop.f32.mrb[0].mxu0
        %604 = vmatprep.mubr.bf16.mxu0 0
        %605 = vmatmul.mubr.bf16.gmra.mrb[0].mxu0 %v519
        %v606 = vpop.f32.mrb[0].mxu0
        %v607 = vadd.f32 %v430, %v606
        %v608 = vpop.f32.mrb[0].mxu0
        %v609 = vpop.f32.mrb[0].mxu0
        %v610 = vadd.f32 %v435, %v609
        %v611 = vpop.f32.mrb[0].mxu0
        %612 = vmatprep.mubr.bf16.mxu0 0
        %613 = vmatmul.mubr.bf16.gmra.mrb[0].mxu0 %v522
        %v614 = vpop.f32.mrb[0].mxu0
        %v615 = vadd.f32 %v440, %v614
        %v616 = vpop.f32.mrb[0].mxu0
        %v617 = vpop.f32.mrb[0].mxu0
        %v618 = vadd.f32 %v445, %v617
        %v619 = vpop.f32.mrb[0].mxu0
        %620 = vdwg.mxu0
        %vm621 = vcmp.gt.f32.partialorder %v559, 0.0
        %vm622 = vcmp.gt.f32.partialorder %v562, 0.0
        %vm623 = vcmp.gt.f32.partialorder %v567, 0.0
        %vm624 = vcmp.gt.f32.partialorder %v570, 0.0
        %vm625 = vcmp.gt.f32.partialorder %v575, 0.0
        %vm626 = vcmp.gt.f32.partialorder %v578, 0.0
        %vm627 = vcmp.gt.f32.partialorder %v583, 0.0
        %vm628 = vcmp.gt.f32.partialorder %v586, 0.0
        %vm629 = vcmp.gt.f32.partialorder %v591, 0.0
        %vm630 = vcmp.gt.f32.partialorder %v594, 0.0
        %vm631 = vcmp.gt.f32.partialorder %v599, 0.0
        %vm632 = vcmp.gt.f32.partialorder %v602, 0.0
        %vm633 = vcmp.gt.f32.partialorder %v607, 0.0
        %vm634 = vcmp.gt.f32.partialorder %v610, 0.0
        %vm635 = vcmp.gt.f32.partialorder %v615, 0.0
        %vm636 = vcmp.gt.f32.partialorder %v618, 0.0
        %v637 = vmul.f32 %v559, 0.01
        %v638 = vmul.f32 %v562, 0.01
        %v639 = vmul.f32 %v567, 0.01
        %v640 = vmul.f32 %v570, 0.01
        %v641 = vmul.f32 %v575, 0.01
        %v642 = vmul.f32 %v578, 0.01
        %v643 = vmul.f32 %v583, 0.01
        %v644 = vmul.f32 %v586, 0.01
        %v645 = vmul.f32 %v591, 0.01
        %v646 = vmul.f32 %v594, 0.01
        %v647 = vmul.f32 %v599, 0.01
        %v648 = vmul.f32 %v602, 0.01
        %v649 = vmul.f32 %v607, 0.01
        %v650 = vmul.f32 %v610, 0.01
        %v651 = vmul.f32 %v615, 0.01
        %v652 = vmul.f32 %v618, 0.01
        %v653 = vsel %vm621, %v559, %v637
        %v654 = vsel %vm622, %v562, %v638
        %v655 = vsel %vm623, %v567, %v639
        %v656 = vsel %vm624, %v570, %v640
        %v657 = vsel %vm625, %v575, %v641
        %v658 = vsel %vm626, %v578, %v642
        %v659 = vsel %vm627, %v583, %v643
        %v660 = vsel %vm628, %v586, %v644
        %v661 = vsel %vm629, %v591, %v645
        %v662 = vsel %vm630, %v594, %v646
        %v663 = vsel %vm631, %v599, %v647
        %v664 = vsel %vm632, %v602, %v648
        %v665 = vsel %vm633, %v607, %v649
        %v666 = vsel %vm634, %v610, %v650
        %v667 = vsel %vm635, %v615, %v651
        %v668 = vsel %vm636, %v618, %v652
        %v669 = vld [vmem:[%s3] sm:$0xf]
        %v670 = vld [vmem:[%s3 + $0x4] sm:$0xf]
        %v671 = vld [vmem:[%s3 + $0x8] sm:$0xf]
        %v672 = vld [vmem:[%s3 + $0xc] sm:$0xf]
        %v673 = vld [vmem:[%s3 + $0x10] sm:$0xf]
        %v674 = vld [vmem:[%s3 + $0x14] sm:$0xf]
        %v675 = vld [vmem:[%s3 + $0x18] sm:$0xf]
        %v676 = vld [vmem:[%s3 + $0x1c] sm:$0xf]
        %v677 = vld [vmem:[%s3 + $0x20] sm:$0xf]
        %v678 = vld [vmem:[%s3 + $0x24] sm:$0xf]
        %v679 = vld [vmem:[%s3 + $0x28] sm:$0xf]
        %v680 = vld [vmem:[%s3 + $0x2c] sm:$0xf]
        %v681 = vld [vmem:[%s3 + $0x30] sm:$0xf]
        %v682 = vld [vmem:[%s3 + $0x34] sm:$0xf]
        %v683 = vld [vmem:[%s3 + $0x38] sm:$0xf]
        %v684 = vld [vmem:[%s3 + $0x3c] sm:$0xf]
        %v685 = vpack.c.bf16 %v654, %v653
        %v686 = vpack.c.bf16 %v656, %v655
        %v687 = vpack.c.bf16 %v658, %v657
        %v688 = vpack.c.bf16 %v660, %v659
        %v689 = vpack.c.bf16 %v662, %v661
        %v690 = vpack.c.bf16 %v664, %v663
        %v691 = vpack.c.bf16 %v666, %v665
        %v692 = vpack.c.bf16 %v668, %v667
        %v693 = vld [vmem:[%s4] sm:$0xff]
        %v694 = vld [vmem:[%s4 + $0x8] sm:$0xff]
        %v695 = vld [vmem:[%s4 + $0x10] sm:$0xff]
        %v696 = vld [vmem:[%s4 + $0x18] sm:$0xff]
        %v697 = vld [vmem:[%s4 + $0x20] sm:$0xff]
        %v698 = vld [vmem:[%s4 + $0x28] sm:$0xff]
        %v699 = vld [vmem:[%s4 + $0x30] sm:$0xff]
        %v700 = vld [vmem:[%s4 + $0x38] sm:$0xff]
        %v701 = vld [vmem:[%s4 + $0x40] sm:$0xff]
        %v702 = vld [vmem:[%s4 + $0x48] sm:$0xff]
        %v703 = vld [vmem:[%s4 + $0x50] sm:$0xff]
        %v704 = vld [vmem:[%s4 + $0x58] sm:$0xff]
        %v705 = vld [vmem:[%s4 + $0x60] sm:$0xff]
        %v706 = vld [vmem:[%s4 + $0x68] sm:$0xff]
        %v707 = vld [vmem:[%s4 + $0x70] sm:$0xff]
        %v708 = vld [vmem:[%s4 + $0x78] sm:$0xff]
        %710 = vset.pattern.permute.xlu0 0
        %711 = vperm.xlu0 %710, %v693
        %v712 = vpop.permute.xlu0 %711
        %715 = vset.pattern.permute.xlu0 0
        %716 = vperm.xlu0 %715, %v694
        %v717 = vpop.permute.xlu0 %716
        %720 = vset.pattern.permute.xlu0 0
        %721 = vperm.xlu0 %720, %v695
        %v722 = vpop.permute.xlu0 %721
        %725 = vset.pattern.permute.xlu0 0
        %726 = vperm.xlu0 %725, %v696
        %v727 = vpop.permute.xlu0 %726
        %730 = vset.pattern.permute.xlu0 0
        %731 = vperm.xlu0 %730, %v697
        %v732 = vpop.permute.xlu0 %731
        %735 = vset.pattern.permute.xlu0 0
        %736 = vperm.xlu0 %735, %v698
        %v737 = vpop.permute.xlu0 %736
        %740 = vset.pattern.permute.xlu0 0
        %741 = vperm.xlu0 %740, %v699
        %v742 = vpop.permute.xlu0 %741
        %745 = vset.pattern.permute.xlu0 0
        %746 = vperm.xlu0 %745, %v700
        %v747 = vpop.permute.xlu0 %746
        %750 = vset.pattern.permute.xlu0 0
        %751 = vperm.xlu0 %750, %v701
        %v752 = vpop.permute.xlu0 %751
        %755 = vset.pattern.permute.xlu0 0
        %756 = vperm.xlu0 %755, %v702
        %v757 = vpop.permute.xlu0 %756
        %760 = vset.pattern.permute.xlu0 0
        %761 = vperm.xlu0 %760, %v703
        %v762 = vpop.permute.xlu0 %761
        %765 = vset.pattern.permute.xlu0 0
        %766 = vperm.xlu0 %765, %v704
        %v767 = vpop.permute.xlu0 %766
        %770 = vset.pattern.permute.xlu0 0
        %771 = vperm.xlu0 %770, %v705
        %v772 = vpop.permute.xlu0 %771
        %775 = vset.pattern.permute.xlu0 0
        %776 = vperm.xlu0 %775, %v706
        %v777 = vpop.permute.xlu0 %776
        %780 = vset.pattern.permute.xlu0 0
        %781 = vperm.xlu0 %780, %v707
        %v782 = vpop.permute.xlu0 %781
        %785 = vset.pattern.permute.xlu0 0
        %786 = vperm.xlu0 %785, %v708
        %v787 = vpop.permute.xlu0 %786
        %v805 = vunpack.c.l.b16 %v669
        %v806 = vunpack.c.l.b16 %v670
        %v807 = vunpack.c.l.b16 %v671
        %v808 = vunpack.c.l.b16 %v672
        %v809 = vunpack.c.l.b16 %v673
        %v810 = vunpack.c.l.b16 %v674
        %v811 = vunpack.c.l.b16 %v675
        %v812 = vunpack.c.l.b16 %v676
        %v813 = vunpack.c.l.b16 %v677
        %v814 = vunpack.c.l.b16 %v678
        %v815 = vunpack.c.l.b16 %v679
        %v816 = vunpack.c.l.b16 %v680
        %v817 = vunpack.c.l.b16 %v681
        %v818 = vunpack.c.l.b16 %v682
        %v819 = vunpack.c.l.b16 %v683
        %v820 = vunpack.c.l.b16 %v684
        %v821 = vpack.c.b16 %v806, %v805
        %v822 = vpack.c.b16 %v808, %v807
        %v823 = vpack.c.b16 %v810, %v809
        %v824 = vpack.c.b16 %v812, %v811
        %v825 = vpack.c.b16 %v814, %v813
        %v826 = vpack.c.b16 %v816, %v815
        %v827 = vpack.c.b16 %v818, %v817
        %v828 = vpack.c.b16 %v820, %v819
        %837 = vmatprep.subr.bf16.mxu0 0
        %838 = vmatpush1.bf16.msra.mxu0 %v685
        %839 = vmatprep.subr.bf16.mxu0 0
        %840 = vmatpush1.bf16.msra.mxu0 %v686
        %841 = vmatprep.subr.bf16.mxu0 0
        %842 = vmatpush1.bf16.msra.mxu0 %v687
        %843 = vmatprep.subr.bf16.mxu0 0
        %844 = vmatpush1.bf16.msra.mxu0 %v688
        %845 = vmatprep.subr.bf16.mxu0 0
        %846 = vmatpush1.bf16.msra.mxu0 %v689
        %847 = vmatprep.subr.bf16.mxu0 0
        %848 = vmatpush1.bf16.msra.mxu0 %v690
        %849 = vmatprep.subr.bf16.mxu0 0
        %850 = vmatpush1.bf16.msra.mxu0 %v691
        %851 = vmatprep.subr.bf16.mxu0 0
        %852 = vmatpush1.bf16.msra.mxu0 %v692
        %853 = vmatprep.subr.bf16.mxu0 0
        %854 = vmatpush1.bf16.msra.mxu0 0
        %855 = vmatprep.subr.bf16.mxu0 0
        %856 = vmatpush1.bf16.msra.mxu0 0
        %857 = vmatprep.subr.bf16.mxu0 0
        %858 = vmatpush1.bf16.msra.mxu0 0
        %859 = vmatprep.subr.bf16.mxu0 0
        %860 = vmatpush1.bf16.msra.mxu0 0
        %861 = vmatprep.subr.bf16.mxu0 0
        %862 = vmatpush1.bf16.msra.mxu0 0
        %863 = vmatprep.subr.bf16.mxu0 0
        %864 = vmatpush1.bf16.msra.mxu0 0
        %865 = vmatprep.subr.bf16.mxu0 0
        %866 = vmatpush1.bf16.msra.mxu0 0
        %867 = vmatprep.subr.bf16.mxu0 0
        %868 = vmatpush1.bf16.msra.mxu0 0
        %869 = vmatprep.mubr.bf16.mxu0 0
        %870 = vmatmul.mubr.bf16.gmra.mrb[0].mxu0 %v821
        %v871 = vpop.f32.mrb[0].mxu0
        %v872 = vadd.f32 %v712, %v871
        %v873 = vpop.f32.mrb[0].mxu0
        %v874 = vpop.f32.mrb[0].mxu0
        %v875 = vadd.f32 %v717, %v874
        %v876 = vpop.f32.mrb[0].mxu0
        %877 = vmatprep.mubr.bf16.mxu0 0
        %878 = vmatmul.mubr.bf16.gmra.mrb[0].mxu0 %v822
        %v879 = vpop.f32.mrb[0].mxu0
        %v880 = vadd.f32 %v722, %v879
        %v881 = vpop.f32.mrb[0].mxu0
        %v882 = vpop.f32.mrb[0].mxu0
        %v883 = vadd.f32 %v727, %v882
        %v884 = vpop.f32.mrb[0].mxu0
        %885 = vmatprep.mubr.bf16.mxu0 0
        %886 = vmatmul.mubr.bf16.gmra.mrb[0].mxu0 %v823
        %v887 = vpop.f32.mrb[0].mxu0
        %v888 = vadd.f32 %v732, %v887
        %v889 = vpop.f32.mrb[0].mxu0
        %v890 = vpop.f32.mrb[0].mxu0
        %v891 = vadd.f32 %v737, %v890
        %v892 = vpop.f32.mrb[0].mxu0
        %893 = vmatprep.mubr.bf16.mxu0 0
        %894 = vmatmul.mubr.bf16.gmra.mrb[0].mxu0 %v824
        %v895 = vpop.f32.mrb[0].mxu0
        %v896 = vadd.f32 %v742, %v895
        %v897 = vpop.f32.mrb[0].mxu0
        %v898 = vpop.f32.mrb[0].mxu0
        %v899 = vadd.f32 %v747, %v898
        %v900 = vpop.f32.mrb[0].mxu0
        %901 = vmatprep.mubr.bf16.mxu0 0
        %902 = vmatmul.mubr.bf16.gmra.mrb[0].mxu0 %v825
        %v903 = vpop.f32.mrb[0].mxu0
        %v904 = vadd.f32 %v752, %v903
        %v905 = vpop.f32.mrb[0].mxu0
        %v906 = vpop.f32.mrb[0].mxu0
        %v907 = vadd.f32 %v757, %v906
        %v908 = vpop.f32.mrb[0].mxu0
        %909 = vmatprep.mubr.bf16.mxu0 0
        %910 = vmatmul.mubr.bf16.gmra.mrb[0].mxu0 %v826
        %v911 = vpop.f32.mrb[0].mxu0
        %v912 = vadd.f32 %v762, %v911
        %v913 = vpop.f32.mrb[0].mxu0
        %v914 = vpop.f32.mrb[0].mxu0
        %v915 = vadd.f32 %v767, %v914
        %v916 = vpop.f32.mrb[0].mxu0
        %917 = vmatprep.mubr.bf16.mxu0 0
        %918 = vmatmul.mubr.bf16.gmra.mrb[0].mxu0 %v827
        %v919 = vpop.f32.mrb[0].mxu0
        %v920 = vadd.f32 %v772, %v919
        %v921 = vpop.f32.mrb[0].mxu0
        %v922 = vpop.f32.mrb[0].mxu0
        %v923 = vadd.f32 %v777, %v922
        %v924 = vpop.f32.mrb[0].mxu0
        %925 = vmatprep.mubr.bf16.mxu0 0
        %926 = vmatmul.mubr.bf16.gmra.mrb[0].mxu0 %v828
        %v927 = vpop.f32.mrb[0].mxu0
        %v928 = vadd.f32 %v782, %v927
        %v929 = vpop.f32.mrb[0].mxu0
        %v930 = vpop.f32.mrb[0].mxu0
        %v931 = vadd.f32 %v787, %v930
        %v932 = vpop.f32.mrb[0].mxu0
        %933 = vdwg.mxu0
        %vm934 = vcmp.gt.f32.partialorder %v872, 0.0
        %vm935 = vcmp.gt.f32.partialorder %v875, 0.0
        %vm936 = vcmp.gt.f32.partialorder %v880, 0.0
        %vm937 = vcmp.gt.f32.partialorder %v883, 0.0
        %vm938 = vcmp.gt.f32.partialorder %v888, 0.0
        %vm939 = vcmp.gt.f32.partialorder %v891, 0.0
        %vm940 = vcmp.gt.f32.partialorder %v896, 0.0
        %vm941 = vcmp.gt.f32.partialorder %v899, 0.0
        %vm942 = vcmp.gt.f32.partialorder %v904, 0.0
        %vm943 = vcmp.gt.f32.partialorder %v907, 0.0
        %vm944 = vcmp.gt.f32.partialorder %v912, 0.0
        %vm945 = vcmp.gt.f32.partialorder %v915, 0.0
        %vm946 = vcmp.gt.f32.partialorder %v920, 0.0
        %vm947 = vcmp.gt.f32.partialorder %v923, 0.0
        %vm948 = vcmp.gt.f32.partialorder %v928, 0.0
        %vm949 = vcmp.gt.f32.partialorder %v931, 0.0
        %v950 = vmul.f32 %v872, 0.01
        %v951 = vmul.f32 %v875, 0.01
        %v952 = vmul.f32 %v880, 0.01
        %v953 = vmul.f32 %v883, 0.01
        %v954 = vmul.f32 %v888, 0.01
        %v955 = vmul.f32 %v891, 0.01
        %v956 = vmul.f32 %v896, 0.01
        %v957 = vmul.f32 %v899, 0.01
        %v958 = vmul.f32 %v904, 0.01
        %v959 = vmul.f32 %v907, 0.01
        %v960 = vmul.f32 %v912, 0.01
        %v961 = vmul.f32 %v915, 0.01
        %v962 = vmul.f32 %v920, 0.01
        %v963 = vmul.f32 %v923, 0.01
        %v964 = vmul.f32 %v928, 0.01
        %v965 = vmul.f32 %v931, 0.01
        %v966 = vsel %vm934, %v872, %v950
        %v967 = vsel %vm935, %v875, %v951
        %v968 = vsel %vm936, %v880, %v952
        %v969 = vsel %vm937, %v883, %v953
        %v970 = vsel %vm938, %v888, %v954
        %v971 = vsel %vm939, %v891, %v955
        %v972 = vsel %vm940, %v896, %v956
        %v973 = vsel %vm941, %v899, %v957
        %v974 = vsel %vm942, %v904, %v958
        %v975 = vsel %vm943, %v907, %v959
        %v976 = vsel %vm944, %v912, %v960
        %v977 = vsel %vm945, %v915, %v961
        %v978 = vsel %vm946, %v920, %v962
        %v979 = vsel %vm947, %v923, %v963
        %v980 = vsel %vm948, %v928, %v964
        %v981 = vsel %vm949, %v931, %v965
        %v982 = vld [vmem:[%s5] sm:$0x1]
        %v983 = vpack.c.bf16 %v967, %v966
        %v984 = vpack.c.bf16 %v969, %v968
        %v985 = vpack.c.bf16 %v971, %v970
        %v986 = vpack.c.bf16 %v973, %v972
        %v987 = vpack.c.bf16 %v975, %v974
        %v988 = vpack.c.bf16 %v977, %v976
        %v989 = vpack.c.bf16 %v979, %v978
        %v990 = vpack.c.bf16 %v981, %v980
        %s991 = sld [smem:[#allocation2]]
        %v992 = vstv %s991
        %993 = vmatprep.subr.bf16.mxu0 0
        %994 = vmatpush1.bf16.msra.mxu0 %v983
        %995 = vmatprep.subr.bf16.mxu0 0
        %996 = vmatpush1.bf16.msra.mxu0 %v984
        %997 = vmatprep.subr.bf16.mxu0 0
        %998 = vmatpush1.bf16.msra.mxu0 %v985
        %999 = vmatprep.subr.bf16.mxu0 0
        %1000 = vmatpush1.bf16.msra.mxu0 %v986
        %1001 = vmatprep.subr.bf16.mxu0 0
        %1002 = vmatpush1.bf16.msra.mxu0 %v987
        %1003 = vmatprep.subr.bf16.mxu0 0
        %1004 = vmatpush1.bf16.msra.mxu0 %v988
        %1005 = vmatprep.subr.bf16.mxu0 0
        %1006 = vmatpush1.bf16.msra.mxu0 %v989
        %1007 = vmatprep.subr.bf16.mxu0 0
        %1008 = vmatpush1.bf16.msra.mxu0 %v990
        %1009 = vmatprep.subr.bf16.mxu0 0
        %1010 = vmatpush1.bf16.msra.mxu0 0
        %1011 = vmatprep.subr.bf16.mxu0 0
        %1012 = vmatpush1.bf16.msra.mxu0 0
        %1013 = vmatprep.subr.bf16.mxu0 0
        %1014 = vmatpush1.bf16.msra.mxu0 0
        %1015 = vmatprep.subr.bf16.mxu0 0
        %1016 = vmatpush1.bf16.msra.mxu0 0
        %1017 = vmatprep.subr.bf16.mxu0 0
        %1018 = vmatpush1.bf16.msra.mxu0 0
        %1019 = vmatprep.subr.bf16.mxu0 0
        %1020 = vmatpush1.bf16.msra.mxu0 0
        %1021 = vmatprep.subr.bf16.mxu0 0
        %1022 = vmatpush1.bf16.msra.mxu0 0
        %1023 = vmatprep.subr.bf16.mxu0 0
        %1024 = vmatpush1.bf16.msra.mxu0 0
        %1025 = vmatprep.mubr.bf16.mxu0 0
        %1026 = vmatmul.mubr.bf16.gmra.mrb[0].mxu0 %v982
        %v1027 = vpop.f32.mrb[0].mxu0
        %v1028 = vadd.f32 %v992, %v1027
        %v1029 = vpop.f32.mrb[0].mxu0
        %v1030 = vpop.f32.mrb[0].mxu0
        %v1031 = vpop.f32.mrb[0].mxu0
        %1032 = vdwg.mxu0
        %v1033 = vxor.u32 %v1028, 2147483648
        %v1034 = vmul.f32 %v1033, 1.442695
        %v1035 = vpow.pop %v1034
        %v1036 = vadd.f32 %v1035, 1.0
        %v1037 = vrcp.pop %v1036
        %v1038 = vmul.f32 1.0, %v1037
        %1039 = vst [vmem:[%s329] sm:$0x1] %v1038
        %s1040 = sand.u32 %s182, 1
        %s1041 = scalar_lea.sflag [#allocation5], %s1040
        %s1042 = sand.u32 %s182, 1
        %s1043 = scalar_lea.vmem [#allocation4], %s1042
        // Predicated region
        $region90: #{tpu_custom_call.1} parent=84 // pred_check
          %p1044 = pneg %p192
        $region91: #{tpu_custom_call.1} parent=84 // pred_check_branch
          %1046 = sbr.rel (%p1044) target = $region93
        $region92: #{tpu_custom_call.1} parent=84 // pred_region
          %s1048 = ssub.s32 16, 16
          %1049 = vsyncadd %s1041, %s1048
          %s1050 = smul.addr %s22, 16
          %s1051 = scalar_lea.hbm %s7, %s1050
          %s1053 = sshll.u32 %s1043, 4
          %s1054 = int_to_ptr.vmem [resolvable:$true] %s1053
          %1056 = dma.vmem_to_hbm [thread:$0]  %s1054, 16, %s1051, %s1041
        $region93: #{tpu_custom_call.1} parent=84 // pred_fallthru
          _
      $region85: #{tpu_custom_call.1} parent=5 // pred_fallthru
        _
      %p1057 = scmp.le.s32.totalorder 2, %s17
      // Predicated region
      $region94: #{tpu_custom_call.1} parent=5 // pred_check
        %p1058 = pneg %p1057
      $region95: #{tpu_custom_call.1} parent=5 // pred_check_branch
        %1060 = sbr.rel (%p1058) target = $region97
      $region96: #{tpu_custom_call.1} parent=5 // pred_region
        %s1061 = ssub.s32 %s17, 2
        // Predicated region
        $region98: #{tpu_custom_call.1} parent=96 // pred_check
          %p1062 = pneg %p198
        $region99: #{tpu_custom_call.1} parent=96 // pred_check_branch
          %1064 = sbr.rel (%p1062) target = $region101
        $region100: #{tpu_custom_call.1} parent=96 // pred_region
          %s1065 = sand.u32 %s183, 1
          %s1066 = scalar_lea.sflag [#allocation5], %s1065
          %s1067 = sand.u32 %s183, 1
          %s1068 = scalar_lea.vmem [#allocation4], %s1067
          %1069 = dma.done %s1066, 16
        $region101: #{tpu_custom_call.1} parent=96 // pred_fallthru
          _
      $region97: #{tpu_custom_call.1} parent=5 // pred_fallthru
        _
    $region6: #{tpu_custom_call.1} parent=1 // loop_footer
      %s21 = sadd.s32 1, %s17
    $region7: #{tpu_custom_call.1} parent=1 // loop_footer_branch
      %16 = sbr.rel target = $region3
    $region8: #{tpu_custom_call.1} parent=1 // loop_exit
      _
    %1070 = vsyncpa [#allocation5], 1
    %s1071 = scalar_lea.sflag [#allocation5], 1
    %1072 = vsyncpa %s1071, 1

</llo_original>
